<compile_context>
chip_gen: v7x
topology: tpu7x:2x2x1
jax: 0.10.0
libtpu: 0.0.40
codegen_flags: <defaults>
</compile_context>

<pallas_src>
import functools

import jax
import jax.numpy as jnp
from jax.experimental import pallas as pl
from jax.experimental.pallas import tpu as pltpu

HIDDEN = 256     # RLlib FCNet default fcnet_hiddens=[256, 256], fcnet_activation='tanh'
OUT_PAD = 128    # lane-dense output slab width (multiple of 128)


def _round_up(x, m):
    return (x + m - 1) // m * m


def _pick_act_dtype():
    """tanh dtype: bf16 on chips with a bf16 EUP (v6e/v7x), f32 elsewhere (v5e, ...)."""
    try:
        kind = jax.devices()[0].device_kind.lower()
    except Exception:
        return jnp.float32
    if ("v6" in kind) or ("v7" in kind) or ("tpu7" in kind):
        return jnp.bfloat16
    return jnp.float32


def _critic_kernel(flat_ref,
                   w1_ref, b1_ref,
                   wa2_ref, ba2_ref, wv2_ref, bv2_ref,
                   w3_ref, b3_ref,
                   out_ref, *, act_dtype):
    """Fused action-model + value-model MLPs on one batch tile.

    Layer 1 is a single merged matmul (action W1 zero-padded over obs_flat, value W1
    alongside -> (d_flat, 2H)).  Layer 2 stays per-branch.  Layer 3 multiplies the
    lane-concatenated (tile_b, 2H) hidden by a pre-stacked (2H, OUT_PAD) head matrix:
        cols [0:num_outputs] -> action logits, col [num_outputs] -> value, rest zeros.
    """
    bf16 = jnp.bfloat16
    x = flat_ref[...].astype(bf16)

    # Layer 1 (merged): one MXU pass feeds both branches.
    h1 = jnp.tanh((jnp.dot(x, w1_ref[...], preferred_element_type=jnp.float32)
                   + b1_ref[...]).astype(act_dtype)).astype(bf16)
    ha1 = h1[:, :HIDDEN]          # lane slice at 256 -> tile-aligned, free
    hv1 = h1[:, HIDDEN:]

    # Layer 2 (per branch), bf16 MXU + f32 accumulate, tanh in act_dtype.
    ha2 = jnp.tanh((jnp.dot(ha1, wa2_ref[...], preferred_element_type=jnp.float32)
                    + ba2_ref[...]).astype(act_dtype)).astype(bf16)
    hv2 = jnp.tanh((jnp.dot(hv1, wv2_ref[...], preferred_element_type=jnp.float32)
                    + bv2_ref[...]).astype(act_dtype)).astype(bf16)

    # Layer 3 (stacked heads): one MXU pass, one bias add, lane-dense store.
    h2 = jnp.concatenate([ha2, hv2], axis=-1)      # (tile_b, 2H), tile-aligned concat
    out = jnp.dot(h2, w3_ref[...], preferred_element_type=jnp.float32) + b3_ref[...]
    out_ref[...] = out.astype(out_ref.dtype)


def fused_critic_call(obs_flat, packed_params, tile_b=None, act_dtype=None):
    """Run the fused centralized-critic kernel over a parallel batch grid."""
    B, d_flat = obs_flat.shape
    if act_dtype is None:
        act_dtype = _pick_act_dtype()

    if tile_b is None:
        # >= 2 grid steps for non-trivial batches (megacore on v7x), multiple of 256,
        # capped at 1024 to stay comfortable in v7x's 64 MiB VMEM.
        tile_b = max(256, min(1024, _round_up(pl.cdiv(B, 2), 256)))
    # Never overshoot tiny batches; keep a sublane multiple.
    tile_b = _round_up(max(8, min(tile_b, _round_up(B, 8))), 8)

    grid = (pl.cdiv(B, tile_b),)   # last block may be partial; rows are independent

    weights = packed_params  # (w1c, b1c, wa2, ba2, wv2, bv2, w3s, b3c) -- all 2D

    def resident_spec(a):
        # Constant block index -> DMA'd once, stays resident in VMEM.
        return pl.BlockSpec(a.shape, lambda i: (0, 0))

    flops = 2 * B * (d_flat * 2 * HIDDEN + 2 * HIDDEN * HIDDEN + 2 * HIDDEN * OUT_PAD)
    transcendentals = 4 * B * HIDDEN
    bytes_accessed = (int(obs_flat.size) * obs_flat.dtype.itemsize
                      + B * OUT_PAD * 2
                      + sum(int(w.size) * w.dtype.itemsize for w in weights))

    kernel = functools.partial(_critic_kernel, act_dtype=act_dtype)

    out = pl.pallas_call(
        kernel,
        out_shape=jax.ShapeDtypeStruct((B, OUT_PAD), jnp.bfloat16),
        grid=grid,
        in_specs=[pl.BlockSpec((tile_b, d_flat), lambda i: (i, 0))]
                 + [resident_spec(w) for w in weights],
        out_specs=pl.BlockSpec((tile_b, OUT_PAD), lambda i: (i, 0)),
        compiler_params=pltpu.CompilerParams(
            dimension_semantics=("parallel",)),
        cost_estimate=pl.CostEstimate(flops=flops,
                                      transcendentals=transcendentals,
                                      bytes_accessed=bytes_accessed),
    )(obs_flat, *weights)
    return out


def init_mlp_params(key, in_dim, hidden, out_dim):
    """Deterministic synthetic init (shapes match RLlib FCNet); biases 2D for TPU layout."""
    k1, k2, k3, k4, k5, k6 = jax.random.split(key, 6)
    w1 = jax.random.normal(k1, (in_dim, hidden), jnp.float32) / jnp.sqrt(in_dim)
    b1 = jax.random.normal(k4, (1, hidden), jnp.float32) * 0.01
    w2 = jax.random.normal(k2, (hidden, hidden), jnp.float32) / jnp.sqrt(hidden)
    b2 = jax.random.normal(k5, (1, hidden), jnp.float32) * 0.01
    w3 = jax.random.normal(k3, (hidden, out_dim), jnp.float32) / jnp.sqrt(hidden)
    b3 = jax.random.normal(k6, (1, out_dim), jnp.float32) * 0.01
    return (w1, b1, w2, b2, w3, b3)


def pack_params(action_params, value_params, num_outputs, d_flat, own_start=0):
    """Pack both parameter sets into the kernel's merged / stacked bf16 layout.

    own_start: column offset of own_obs inside obs_flat (action W1 is zero-padded
    everywhere else, so `obs_flat @ W1a_padded == own_obs @ W1a`).
    """
    wa1, ba1, wa2, ba2, wa3, ba3 = action_params
    wv1, bv1, wv2, bv2, wv3, bv3 = value_params
    d_own, H = wa1.shape
    assert wv1.shape[0] == d_flat and own_start + d_own <= d_flat
    assert num_outputs + 1 <= OUT_PAD
    bf16 = jnp.bfloat16

    # Layer-1 merge: (d_flat, 2H), action half zero outside own_obs columns.
    wa1_full = jnp.zeros((d_flat, H), jnp.float32).at[own_start:own_start + d_own, :].set(wa1)
    w1c = jnp.concatenate([wa1_full, wv1], axis=1)
    b1c = jnp.concatenate([ba1, bv1], axis=1)

    # Layer-3 stack: (2H, OUT_PAD), disjoint zero-padded head columns.
    wa3p = jnp.zeros((H, OUT_PAD), jnp.float32).at[:, :num_outputs].set(wa3)
    wv3p = jnp.zeros((H, OUT_PAD), jnp.float32).at[:, num_outputs:num_outputs + 1].set(wv3)
    w3s = jnp.concatenate([wa3p, wv3p], axis=0)
    b3c = (jnp.zeros((1, OUT_PAD), jnp.float32)
           .at[:, :num_outputs].set(ba3)
           .at[:, num_outputs:num_outputs + 1].set(bv3))

    return (w1c.astype(bf16), b1c,
            wa2.astype(bf16), ba2, wv2.astype(bf16), bv2,
            w3s.astype(bf16), b3c)


def centralized_critic_forward(obs_flat, packed_params, num_outputs, tile_b=None):
    """Mirrors CustomTorchCentralizedCriticModel.forward + value_function.

    Returns (action_logits [B, num_outputs] f32, value [B] f32).
    """
    out = fused_critic_call(obs_flat, packed_params, tile_b=tile_b)
    head = out[:, :num_outputs + 1].astype(jnp.float32)   # single narrow readback
    return head[:, :num_outputs], head[:, num_outputs]


def _ref_mlp(x, w1, b1, w2, b2, w3, b3):
    """Pure-JAX reference with the same bf16-operand / f32-accumulate contract."""
    bf16 = jnp.bfloat16

    def mm(a, w):
        return jnp.dot(a.astype(bf16), w.astype(bf16),
                       preferred_element_type=jnp.float32)

    h1 = jnp.tanh(mm(x, w1) + b1)
    h2 = jnp.tanh(mm(h1, w2) + b2)
    return mm(h2, w3) + b3


if __name__ == "__main__":
    key = jax.random.PRNGKey(0)
    k_own, k_opp, k_act, k_amodel, k_vmodel, k_big = jax.random.split(key, 6)

    batch = 2
    own_obs_dim = 20        # action_model's Box(low=-1, high=1, shape=(20,))
    opp_obs_dim = 20        # opponent observation
    num_outputs = 4         # action logits / opponent_action one-hot dim

    own_obs = jax.random.uniform(k_own, (batch, own_obs_dim), jnp.float32, -1.0, 1.0)
    opponent_obs = jax.random.uniform(k_opp, (batch, opp_obs_dim), jnp.float32, -1.0, 1.0)
    opponent_action = jax.random.uniform(k_act, (batch, num_outputs), jnp.float32, 0.0, 1.0)
    # obs_flat = flattened dict obs: own_obs ++ opponent_obs ++ opponent_action
    obs_flat = jnp.concatenate([own_obs, opponent_obs, opponent_action], axis=-1)
    d_flat = obs_flat.shape[-1]

    action_params = init_mlp_params(k_amodel, own_obs_dim, HIDDEN, num_outputs)
    value_params = init_mlp_params(k_vmodel, d_flat, HIDDEN, 1)
    packed = pack_params(action_params, value_params, num_outputs, d_flat, own_start=0)

    # --- small demo batch (single partial block) ---
    logits, value = centralized_critic_forward(obs_flat, packed, num_outputs)
    logits = jax.block_until_ready(logits)
    value = jax.block_until_ready(value)

    ref_logits = _ref_mlp(own_obs, *action_params)
    ref_value = jnp.reshape(_ref_mlp(obs_flat, *value_params), (-1,))
    assert logits.shape == (batch, num_outputs)
    assert value.shape == (batch,)
    assert jnp.allclose(logits, ref_logits, atol=3e-2, rtol=3e-2)
    assert jnp.allclose(value, ref_value, atol=3e-2, rtol=3e-2)

    # --- larger non-multiple batch: multi-step grid + partial last block ---
    big_b = 300
    big_own = jax.random.uniform(k_big, (big_b, own_obs_dim), jnp.float32, -1.0, 1.0)
    big_flat = jnp.concatenate(
        [big_own,
         jax.random.uniform(jax.random.fold_in(k_big, 1), (big_b, opp_obs_dim),
                            jnp.float32, -1.0, 1.0),
         jax.random.uniform(jax.random.fold_in(k_big, 2), (big_b, num_outputs),
                            jnp.float32, 0.0, 1.0)], axis=-1)

    # Auto tile (256 -> grid=(2,), shards across v7x's two TCs).
    big_logits, big_value = centralized_critic_forward(big_flat, packed, num_outputs)
    big_logits = jax.block_until_ready(big_logits)
    big_value = jax.block_until_ready(big_value)

    ref_big_logits = _ref_mlp(big_own, *action_params)
    ref_big_value = jnp.reshape(_ref_mlp(big_flat, *value_params), (-1,))
    assert big_logits.shape == (big_b, num_outputs)
    assert big_value.shape == (big_b,)
    assert jnp.allclose(big_logits, ref_big_logits, atol=3e-2, rtol=3e-2)
    assert jnp.allclose(big_value, ref_big_value, atol=3e-2, rtol=3e-2)

    # Explicit small tile (grid=(3,), exercises the partial-last-block path again).
    sm_logits, sm_value = centralized_critic_forward(big_flat, packed, num_outputs, tile_b=128)
    sm_logits = jax.block_until_ready(sm_logits)
    sm_value = jax.block_until_ready(sm_value)
    assert jnp.allclose(sm_logits, ref_big_logits, atol=3e-2, rtol=3e-2)
    assert jnp.allclose(sm_value, ref_big_value, atol=3e-2, rtol=3e-2)

    print("KERNEL_OK")
</pallas_src>

<mosaic_0001>
module attributes {stable_mosaic.version = 11 : i64} {
  func.func @_critic_kernel(%arg0: i32, %arg1: memref<8x44xf32, #tpu.memory_space<vmem>>, %arg2: memref<44x512xbf16, #tpu.memory_space<vmem>>, %arg3: memref<1x512xf32, #tpu.memory_space<vmem>>, %arg4: memref<256x256xbf16, #tpu.memory_space<vmem>>, %arg5: memref<1x256xf32, #tpu.memory_space<vmem>>, %arg6: memref<256x256xbf16, #tpu.memory_space<vmem>>, %arg7: memref<1x256xf32, #tpu.memory_space<vmem>>, %arg8: memref<512x128xbf16, #tpu.memory_space<vmem>>, %arg9: memref<1x128xf32, #tpu.memory_space<vmem>>, %arg10: memref<8x128xbf16, #tpu.memory_space<vmem>>) attributes {dimension_semantics = [#tpu.dimension_semantics<parallel>], iteration_bounds = array<i64: 1>, scalar_prefetch = 0 : i64, scratch_operands = 0 : i64, tpu.core_type = #tpu.core_type<tc>, window_params = [{transform_indices = @transform_0, window_bounds = array<i64: 8, 44>}, {pipeline_mode = #tpu.pipeline_mode<synchronous>, transform_indices = @transform_1, window_bounds = array<i64: 44, 512>}, {pipeline_mode = #tpu.pipeline_mode<synchronous>, transform_indices = @transform_2, window_bounds = array<i64: 1, 512>}, {pipeline_mode = #tpu.pipeline_mode<synchronous>, transform_indices = @transform_3, window_bounds = array<i64: 256, 256>}, {pipeline_mode = #tpu.pipeline_mode<synchronous>, transform_indices = @transform_4, window_bounds = array<i64: 1, 256>}, {pipeline_mode = #tpu.pipeline_mode<synchronous>, transform_indices = @transform_5, window_bounds = array<i64: 256, 256>}, {pipeline_mode = #tpu.pipeline_mode<synchronous>, transform_indices = @transform_6, window_bounds = array<i64: 1, 256>}, {pipeline_mode = #tpu.pipeline_mode<synchronous>, transform_indices = @transform_7, window_bounds = array<i64: 512, 128>}, {pipeline_mode = #tpu.pipeline_mode<synchronous>, transform_indices = @transform_8, window_bounds = array<i64: 1, 128>}, {transform_indices = @transform_9, window_bounds = array<i64: 8, 128>}]} {
    %c0 = arith.constant 0 : index
    %c0_0 = arith.constant 0 : index
    %0 = vector.load %arg1[%c0, %c0_0] : memref<8x44xf32, #tpu.memory_space<vmem>>, vector<8x44xf32>
    %1 = arith.truncf %0 : vector<8x44xf32> to vector<8x44xbf16>
    %c0_1 = arith.constant 0 : index
    %c0_2 = arith.constant 0 : index
    %2 = vector.load %arg2[%c0_1, %c0_2] : memref<44x512xbf16, #tpu.memory_space<vmem>>, vector<44x512xbf16>
    %cst = arith.constant dense<0.000000e+00> : vector<8x512xf32>
    %3 = tpu.matmul %1, %2, %cst {dimension_numbers = #tpu.dot_dimension_numbers<[1], [0], [0], [1], [0, 0, 1, 1], [], []>} : vector<8x44xbf16>, vector<44x512xbf16>, vector<8x512xf32> -> vector<8x512xf32>
    %c0_3 = arith.constant 0 : index
    %c0_4 = arith.constant 0 : index
    %4 = vector.load %arg3[%c0_3, %c0_4] : memref<1x512xf32, #tpu.memory_space<vmem>>, vector<1x512xf32>
    %5 = vector.broadcast %4 : vector<1x512xf32> to vector<8x512xf32>
    %6 = arith.addf %3, %5 : vector<8x512xf32>
    %7 = math.tanh %6 : vector<8x512xf32>
    %8 = arith.truncf %7 : vector<8x512xf32> to vector<8x512xbf16>
    %9 = vector.extract_strided_slice %8 {offsets = [0, 0], sizes = [8, 256], strides = [1, 1]} : vector<8x512xbf16> to vector<8x256xbf16>
    %10 = vector.extract_strided_slice %8 {offsets = [0, 256], sizes = [8, 256], strides = [1, 1]} : vector<8x512xbf16> to vector<8x256xbf16>
    %c0_5 = arith.constant 0 : index
    %c0_6 = arith.constant 0 : index
    %11 = vector.load %arg4[%c0_5, %c0_6] : memref<256x256xbf16, #tpu.memory_space<vmem>>, vector<256x256xbf16>
    %cst_7 = arith.constant dense<0.000000e+00> : vector<8x256xf32>
    %12 = tpu.matmul %9, %11, %cst_7 {dimension_numbers = #tpu.dot_dimension_numbers<[1], [0], [0], [1], [0, 0, 1, 1], [], []>} : vector<8x256xbf16>, vector<256x256xbf16>, vector<8x256xf32> -> vector<8x256xf32>
    %c0_8 = arith.constant 0 : index
    %c0_9 = arith.constant 0 : index
    %13 = vector.load %arg5[%c0_8, %c0_9] : memref<1x256xf32, #tpu.memory_space<vmem>>, vector<1x256xf32>
    %14 = vector.broadcast %13 : vector<1x256xf32> to vector<8x256xf32>
    %15 = arith.addf %12, %14 : vector<8x256xf32>
    %16 = math.tanh %15 : vector<8x256xf32>
    %17 = arith.truncf %16 : vector<8x256xf32> to vector<8x256xbf16>
    %c0_10 = arith.constant 0 : index
    %c0_11 = arith.constant 0 : index
    %18 = vector.load %arg6[%c0_10, %c0_11] : memref<256x256xbf16, #tpu.memory_space<vmem>>, vector<256x256xbf16>
    %cst_12 = arith.constant dense<0.000000e+00> : vector<8x256xf32>
    %19 = tpu.matmul %10, %18, %cst_12 {dimension_numbers = #tpu.dot_dimension_numbers<[1], [0], [0], [1], [0, 0, 1, 1], [], []>} : vector<8x256xbf16>, vector<256x256xbf16>, vector<8x256xf32> -> vector<8x256xf32>
    %c0_13 = arith.constant 0 : index
    %c0_14 = arith.constant 0 : index
    %20 = vector.load %arg7[%c0_13, %c0_14] : memref<1x256xf32, #tpu.memory_space<vmem>>, vector<1x256xf32>
    %21 = vector.broadcast %20 : vector<1x256xf32> to vector<8x256xf32>
    %22 = arith.addf %19, %21 : vector<8x256xf32>
    %23 = math.tanh %22 : vector<8x256xf32>
    %24 = arith.truncf %23 : vector<8x256xf32> to vector<8x256xbf16>
    %25 = tpu.concatenate %17, %24 in 1 : vector<8x256xbf16>, vector<8x256xbf16> -> vector<8x512xbf16>
    %c0_15 = arith.constant 0 : index
    %c0_16 = arith.constant 0 : index
    %26 = vector.load %arg8[%c0_15, %c0_16] : memref<512x128xbf16, #tpu.memory_space<vmem>>, vector<512x128xbf16>
    %cst_17 = arith.constant dense<0.000000e+00> : vector<8x128xf32>
    %27 = tpu.matmul %25, %26, %cst_17 {dimension_numbers = #tpu.dot_dimension_numbers<[1], [0], [0], [1], [0, 0, 1, 1], [], []>} : vector<8x512xbf16>, vector<512x128xbf16>, vector<8x128xf32> -> vector<8x128xf32>
    %c0_18 = arith.constant 0 : index
    %c0_19 = arith.constant 0 : index
    %28 = vector.load %arg9[%c0_18, %c0_19] : memref<1x128xf32, #tpu.memory_space<vmem>>, vector<1x128xf32>
    %29 = vector.broadcast %28 : vector<1x128xf32> to vector<8x128xf32>
    %30 = arith.addf %27, %29 : vector<8x128xf32>
    %31 = arith.truncf %30 : vector<8x128xf32> to vector<8x128xbf16>
    %c0_20 = arith.constant 0 : index
    %c0_21 = arith.constant 0 : index
    %32 = vector.load %arg10[%c0_20, %c0_21] : memref<8x128xbf16, #tpu.memory_space<vmem>>, vector<8x128xbf16>
    tpu.vector_store %arg10[%c0_20, %c0_21], %31 {strides = array<i32>} : memref<8x128xbf16, #tpu.memory_space<vmem>>, vector<8x128xbf16>,
    return
  }
  func.func @transform_0(%arg0: i32) -> (i32, i32) {
    %c0_i32 = arith.constant 0 : i32
    %c0_i32_0 = arith.constant 0 : i32
    return %arg0, %c0_i32 : i32, i32
  }
  func.func @transform_1(%arg0: i32) -> (i32, i32) {
    %c0_i32 = arith.constant 0 : i32
    %c0_i32_0 = arith.constant 0 : i32
    %c0_i32_1 = arith.constant 0 : i32
    return %c0_i32, %c0_i32_0 : i32, i32
  }
  func.func @transform_2(%arg0: i32) -> (i32, i32) {
    %c0_i32 = arith.constant 0 : i32
    %c0_i32_0 = arith.constant 0 : i32
    %c0_i32_1 = arith.constant 0 : i32
    return %c0_i32, %c0_i32_0 : i32, i32
  }
  func.func @transform_3(%arg0: i32) -> (i32, i32) {
    %c0_i32 = arith.constant 0 : i32
    %c0_i32_0 = arith.constant 0 : i32
    %c0_i32_1 = arith.constant 0 : i32
    return %c0_i32, %c0_i32_0 : i32, i32
  }
  func.func @transform_4(%arg0: i32) -> (i32, i32) {
    %c0_i32 = arith.constant 0 : i32
    %c0_i32_0 = arith.constant 0 : i32
    %c0_i32_1 = arith.constant 0 : i32
    return %c0_i32, %c0_i32_0 : i32, i32
  }
  func.func @transform_5(%arg0: i32) -> (i32, i32) {
    %c0_i32 = arith.constant 0 : i32
    %c0_i32_0 = arith.constant 0 : i32
    %c0_i32_1 = arith.constant 0 : i32
    return %c0_i32, %c0_i32_0 : i32, i32
  }
  func.func @transform_6(%arg0: i32) -> (i32, i32) {
    %c0_i32 = arith.constant 0 : i32
    %c0_i32_0 = arith.constant 0 : i32
    %c0_i32_1 = arith.constant 0 : i32
    return %c0_i32, %c0_i32_0 : i32, i32
  }
  func.func @transform_7(%arg0: i32) -> (i32, i32) {
    %c0_i32 = arith.constant 0 : i32
    %c0_i32_0 = arith.constant 0 : i32
    %c0_i32_1 = arith.constant 0 : i32
    return %c0_i32, %c0_i32_0 : i32, i32
  }
  func.func @transform_8(%arg0: i32) -> (i32, i32) {
    %c0_i32 = arith.constant 0 : i32
    %c0_i32_0 = arith.constant 0 : i32
    %c0_i32_1 = arith.constant 0 : i32
    return %c0_i32, %c0_i32_0 : i32, i32
  }
  func.func @transform_9(%arg0: i32) -> (i32, i32) {
    %c0_i32 = arith.constant 0 : i32
    %c0_i32_0 = arith.constant 0 : i32
    return %arg0, %c0_i32 : i32, i32
  }
}

</mosaic_0001>

<llo_original>
// kernel: tpu_custom_call.1
$region0: #{tpu_custom_call.1}
  #allocation0 [shape = 'u32[]', space=smem, size = 0x4, offset = 0x4, fixed_abs, tag = 'smem constant byte address 0x4 - core index']
  #allocation1 [shape = 'u32[144,128]{1,0:T(1,128)}', space=vmem, size = 0x12000, scoped, tag = 'internal scratch']
  %s0 = inlined_call_operand.hbm [shape: f32[2,44], index: 0, kind: input, shape index: {}]
  %s1 = inlined_call_operand.hbm [shape: bf16[44,512], index: 1, kind: input, shape index: {}]
  %s2 = inlined_call_operand.vmem [shape: f32[1,512], index: 2, kind: input, shape index: {}]
  %s3 = inlined_call_operand.hbm [shape: bf16[256,256], index: 3, kind: input, shape index: {}]
  %s4 = inlined_call_operand.vmem [shape: f32[1,256], index: 4, kind: input, shape index: {}]
  %s5 = inlined_call_operand.hbm [shape: bf16[256,256], index: 5, kind: input, shape index: {}]
  %s6 = inlined_call_operand.vmem [shape: f32[1,256], index: 6, kind: input, shape index: {}]
  %s7 = inlined_call_operand.hbm [shape: bf16[512,128], index: 7, kind: input, shape index: {}]
  %s8 = inlined_call_operand.vmem [shape: f32[1,128], index: 8, kind: input, shape index: {}]
  %s9 = inlined_call_operand.hbm [shape: bf16[2,128], index: 9, kind: output, shape index: {}]
  %s10 = sld [smem:[#allocation0]]
  $region66: #{tpu_custom_call.1} parent=0
    _
  %s12 = ssub.s32 1, %s10
  %s13 = scalar_select 0, %s12, %s10
  $region1: #{tpu_custom_call.1} parent=0
    #allocation2 [shape = 'u8[4096]{0}', space=vmem, size = 0x1000, scoped, tag = 'input window, operand 0, single buffered']
    #allocation3 [shape = 's32[1]{0}', space=sflag, size = 0x4, scoped, tag = 'scoped memory for tpu_custom_call.1']
    #allocation4 [shape = 's32[1]{0}', space=sflag, size = 0x4, scoped, tag = 'scoped memory for tpu_custom_call.1']
    #allocation5 [shape = 'u8[49152]{0}', space=vmem, size = 0xc000, scoped, tag = 'input window, operand 1, single buffered']
    #allocation6 [shape = 's32[1]{0}', space=sflag, size = 0x4, scoped, tag = 'scoped memory for tpu_custom_call.1']
    #allocation7 [shape = 'u8[131072]{0}', space=vmem, size = 0x20000, scoped, tag = 'input window, operand 3, single buffered']
    #allocation8 [shape = 'u8[131072]{0}', space=vmem, size = 0x20000, scoped, tag = 'input window, operand 5, single buffered']
    #allocation9 [shape = 's32[1]{0}', space=sflag, size = 0x4, scoped, tag = 'scoped memory for tpu_custom_call.1']
    #allocation10 [shape = 'u8[131072]{0}', space=vmem, size = 0x20000, scoped, tag = 'input window, operand 7, single buffered']
    #allocation11 [shape = 'u8[2048]{0}', space=vmem, size = 0x800, scoped, tag = 'output window, operand 0, single buffered']
    %14 = vsyncpa [#allocation3], 0
    %15 = vsyncpa [#allocation6], 0
    %16 = vsyncpa [#allocation9], 0
    %17 = vsyncpa [#allocation4], 0
    // Predicated region
    $region2: #{tpu_custom_call.1} parent=1 // pred_check
      _
    $region3: #{tpu_custom_call.1} parent=1 // pred_check_branch
      %19 = sbr.rel (0) target = $region5
    $region4: #{tpu_custom_call.1} parent=1 // pred_region
      %s21 = ssub.s32 128, 32
      %22 = vsyncadd [#allocation3], %s21
      %s23 = sshll.u32 [#allocation2], 4
      %s24 = int_to_ptr.vmem [resolvable:$true] %s23
      %29 = dma.hbm_to_vmem [thread:$0]  %s0, 32, %s24, [#allocation3], 32, 32, 2
    $region5: #{tpu_custom_call.1} parent=1 // pred_fallthru
      _
    // Predicated region
    $region6: #{tpu_custom_call.1} parent=1 // pred_check
      _
    $region7: #{tpu_custom_call.1} parent=1 // pred_check_branch
      %31 = sbr.rel (0) target = $region9
    $region8: #{tpu_custom_call.1} parent=1 // pred_region
      %s33 = ssub.s32 1536, 1536
      %34 = vsyncadd [#allocation6], %s33
      %s35 = sshll.u32 [#allocation5], 4
      %s36 = int_to_ptr.vmem [resolvable:$true] %s35
      %41 = dma.hbm_to_vmem [thread:$0]  %s1, 1536, %s36, [#allocation6], 256, 256, 16
    $region9: #{tpu_custom_call.1} parent=1 // pred_fallthru
      _
    // Predicated region
    $region10: #{tpu_custom_call.1} parent=1 // pred_check
      _
    $region11: #{tpu_custom_call.1} parent=1 // pred_check_branch
      %43 = sbr.rel (0) target = $region13
    $region12: #{tpu_custom_call.1} parent=1 // pred_region
      _
    $region13: #{tpu_custom_call.1} parent=1 // pred_fallthru
      _
    // Predicated region
    $region14: #{tpu_custom_call.1} parent=1 // pred_check
      _
    $region15: #{tpu_custom_call.1} parent=1 // pred_check_branch
      %45 = sbr.rel (0) target = $region17
    $region16: #{tpu_custom_call.1} parent=1 // pred_region
      %s47 = ssub.s32 4096, 4096
      %48 = vsyncadd [#allocation6], %s47
      %s49 = sshll.u32 [#allocation7], 4
      %s50 = int_to_ptr.vmem [resolvable:$true] %s49
      %55 = dma.hbm_to_vmem [thread:$0]  %s3, 4096, %s50, [#allocation6], 128, 128, 8
    $region17: #{tpu_custom_call.1} parent=1 // pred_fallthru
      _
    // Predicated region
    $region18: #{tpu_custom_call.1} parent=1 // pred_check
      _
    $region19: #{tpu_custom_call.1} parent=1 // pred_check_branch
      %57 = sbr.rel (0) target = $region21
    $region20: #{tpu_custom_call.1} parent=1 // pred_region
      _
    $region21: #{tpu_custom_call.1} parent=1 // pred_fallthru
      _
    // Predicated region
    $region22: #{tpu_custom_call.1} parent=1 // pred_check
      _
    $region23: #{tpu_custom_call.1} parent=1 // pred_check_branch
      %59 = sbr.rel (0) target = $region25
    $region24: #{tpu_custom_call.1} parent=1 // pred_region
      %s61 = ssub.s32 4096, 4096
      %62 = vsyncadd [#allocation9], %s61
      %s63 = sshll.u32 [#allocation8], 4
      %s64 = int_to_ptr.vmem [resolvable:$true] %s63
      %69 = dma.hbm_to_vmem [thread:$0]  %s5, 4096, %s64, [#allocation9], 128, 128, 8
    $region25: #{tpu_custom_call.1} parent=1 // pred_fallthru
      _
    // Predicated region
    $region26: #{tpu_custom_call.1} parent=1 // pred_check
      _
    $region27: #{tpu_custom_call.1} parent=1 // pred_check_branch
      %71 = sbr.rel (0) target = $region29
    $region28: #{tpu_custom_call.1} parent=1 // pred_region
      _
    $region29: #{tpu_custom_call.1} parent=1 // pred_fallthru
      _
    // Predicated region
    $region30: #{tpu_custom_call.1} parent=1 // pred_check
      _
    $region31: #{tpu_custom_call.1} parent=1 // pred_check_branch
      %73 = sbr.rel (0) target = $region33
    $region32: #{tpu_custom_call.1} parent=1 // pred_region
      %s75 = ssub.s32 4096, 4096
      %76 = vsyncadd [#allocation9], %s75
      %s77 = sshll.u32 [#allocation10], 4
      %s78 = int_to_ptr.vmem [resolvable:$true] %s77
      %83 = dma.hbm_to_vmem [thread:$0]  %s7, 4096, %s78, [#allocation9], 64, 64, 4
    $region33: #{tpu_custom_call.1} parent=1 // pred_fallthru
      _
    // Predicated region
    $region34: #{tpu_custom_call.1} parent=1 // pred_check
      _
    $region35: #{tpu_custom_call.1} parent=1 // pred_check_branch
      %85 = sbr.rel (0) target = $region37
    $region36: #{tpu_custom_call.1} parent=1 // pred_region
      _
    $region37: #{tpu_custom_call.1} parent=1 // pred_fallthru
      _
    // Predicated region
    $region38: #{tpu_custom_call.1} parent=1 // pred_check
      _
    $region39: #{tpu_custom_call.1} parent=1 // pred_check_branch
      %87 = sbr.rel (0) target = $region41
    $region40: #{tpu_custom_call.1} parent=1 // pred_region
      %88 = dma.done [#allocation3], 128
    $region41: #{tpu_custom_call.1} parent=1 // pred_fallthru
      _
    // Predicated region
    $region42: #{tpu_custom_call.1} parent=1 // pred_check
      _
    $region43: #{tpu_custom_call.1} parent=1 // pred_check_branch
      %90 = sbr.rel (0) target = $region45
    $region44: #{tpu_custom_call.1} parent=1 // pred_region
      %91 = dma.done [#allocation6], 1536
    $region45: #{tpu_custom_call.1} parent=1 // pred_fallthru
      _
    // Predicated region
    $region46: #{tpu_custom_call.1} parent=1 // pred_check
      _
    $region47: #{tpu_custom_call.1} parent=1 // pred_check_branch
      %93 = sbr.rel (0) target = $region49
    $region48: #{tpu_custom_call.1} parent=1 // pred_region
      %94 = dma.done [#allocation6], 4096
    $region49: #{tpu_custom_call.1} parent=1 // pred_fallthru
      _
    // Predicated region
    $region50: #{tpu_custom_call.1} parent=1 // pred_check
      _
    $region51: #{tpu_custom_call.1} parent=1 // pred_check_branch
      %96 = sbr.rel (0) target = $region53
    $region52: #{tpu_custom_call.1} parent=1 // pred_region
      %97 = dma.done [#allocation9], 4096
    $region53: #{tpu_custom_call.1} parent=1 // pred_fallthru
      _
    // Predicated region
    $region54: #{tpu_custom_call.1} parent=1 // pred_check
      _
    $region55: #{tpu_custom_call.1} parent=1 // pred_check_branch
      %99 = sbr.rel (0) target = $region57
    $region56: #{tpu_custom_call.1} parent=1 // pred_region
      %100 = dma.done [#allocation9], 4096
    $region57: #{tpu_custom_call.1} parent=1 // pred_fallthru
      _
    %v102 = vld [vmem:[#allocation2] sm:$0xff]
    %v103 = vpack.c.bf16 %v102, %v102
    %v104 = vld [vmem:[#allocation5] sm:$0xff]
    %v105 = vld [vmem:[#allocation5 + $0x8] sm:$0xff]
    %v106 = vld [vmem:[#allocation5 + $0x10] sm:$0xff]
    %v107 = vld [vmem:[#allocation5 + $0x18] sm:$0xff]
    %v108 = vld [vmem:[#allocation5 + $0x20] sm:$0xff]
    %v109 = vld [vmem:[#allocation5 + $0x28] sm:$0xff]
    %v110 = vld [vmem:[#allocation5 + $0x30] sm:$0xff]
    %v111 = vld [vmem:[#allocation5 + $0x38] sm:$0xff]
    %v112 = vld [vmem:[#allocation5 + $0x40] sm:$0xff]
    %v113 = vld [vmem:[#allocation5 + $0x48] sm:$0xff]
    %v114 = vld [vmem:[#allocation5 + $0x50] sm:$0x33]
    %v115 = vld [vmem:[#allocation5 + $0x58] sm:$0x33]
    %v116 = vld [vmem:[%s2] sm:$0xf]
    %v118 = vlaneseq
    %v119 = vshrl.u32 %v118, 7
    %v120 = vsub.s32 0, %v119
    %v121 = vrot.slane %v116, %v120
    %v122 = vlaneseq
    %v123 = vshrl.u32 %v122, 7
    %v124 = vsub.s32 1, %v123
    %v125 = vrot.slane %v116, %v124
    %v126 = vlaneseq
    %v127 = vshrl.u32 %v126, 7
    %v128 = vsub.s32 2, %v127
    %v129 = vrot.slane %v116, %v128
    %v130 = vlaneseq
    %v131 = vshrl.u32 %v130, 7
    %v132 = vsub.s32 3, %v131
    %v133 = vrot.slane %v116, %v132
    %v150 = vunpack.c.l.b16 %v104
    %v151 = vunpack.c.h.b16 %v104
    %v152 = vunpack.c.l.b16 %v105
    %v153 = vunpack.c.h.b16 %v105
    %v154 = vunpack.c.l.b16 %v106
    %v155 = vunpack.c.h.b16 %v106
    %v156 = vunpack.c.l.b16 %v107
    %v157 = vunpack.c.h.b16 %v107
    %v158 = vunpack.c.l.b16 %v108
    %v159 = vunpack.c.h.b16 %v108
    %v160 = vunpack.c.l.b16 %v109
    %v161 = vunpack.c.h.b16 %v109
    %v162 = vunpack.c.l.b16 %v110
    %v163 = vunpack.c.h.b16 %v110
    %v164 = vunpack.c.l.b16 %v111
    %v165 = vunpack.c.h.b16 %v111
    %v166 = vunpack.c.l.b16 %v112
    %v167 = vunpack.c.h.b16 %v112
    %v168 = vunpack.c.l.b16 %v113
    %v169 = vunpack.c.h.b16 %v113
    %v170 = vunpack.c.l.b16 %v114
    %v171 = vunpack.c.h.b16 %v114
    %v172 = vunpack.c.l.b16 %v115
    %v173 = vunpack.c.h.b16 %v115
    %v174 = vpack.c.b16 %v154, %v150
    %v175 = vpack.c.b16 %v155, %v151
    %v176 = vpack.c.b16 %v156, %v152
    %v177 = vpack.c.b16 %v157, %v153
    %v178 = vpack.c.b16 %v162, %v158
    %v179 = vpack.c.b16 %v163, %v159
    %v180 = vpack.c.b16 %v164, %v160
    %v181 = vpack.c.b16 %v165, %v161
    %v182 = vpack.c.b16 %v170, %v166
    %v183 = vpack.c.b16 %v171, %v167
    %v184 = vpack.c.b16 %v172, %v168
    %v185 = vpack.c.b16 %v173, %v169
    %vm194 = vcmask 359424
    %v196 = vsel %vm194, %v103, 0
    %vm198 = vcmask 1045504
    %v200 = vsel %vm198, %v182, 0
    %v203 = vsel %vm198, %v183, 0
    %v206 = vsel %vm198, %v184, 0
    %v209 = vsel %vm198, %v185, 0
    %211 = vmatprep.subr.bf16.mxu0 %v175
    %212 = vmatpush1.bf16.msra.mxu0 %v174
    %213 = vmatprep.subr.bf16.mxu0 %v179
    %214 = vmatpush1.bf16.msra.mxu0 %v178
    %215 = vmatprep.subr.bf16.mxu0 %v203
    %216 = vmatpush1.bf16.msra.mxu0 %v200
    %217 = vmatprep.subr.bf16.mxu0 0
    %218 = vmatpush1.bf16.msra.mxu0 0
    %219 = vmatprep.subr.bf16.mxu0 0
    %220 = vmatpush1.bf16.msra.mxu0 0
    %221 = vmatprep.subr.bf16.mxu0 0
    %222 = vmatpush1.bf16.msra.mxu0 0
    %223 = vmatprep.subr.bf16.mxu0 0
    %224 = vmatpush1.bf16.msra.mxu0 0
    %225 = vmatprep.subr.bf16.mxu0 0
    %226 = vmatpush1.bf16.msra.mxu0 0
    %227 = vmatprep.subr.bf16.mxu0 0
    %228 = vmatpush1.bf16.msra.mxu0 0
    %229 = vmatprep.subr.bf16.mxu0 0
    %230 = vmatpush1.bf16.msra.mxu0 0
    %231 = vmatprep.subr.bf16.mxu0 0
    %232 = vmatpush1.bf16.msra.mxu0 0
    %233 = vmatprep.subr.bf16.mxu0 0
    %234 = vmatpush1.bf16.msra.mxu0 0
    %235 = vmatprep.subr.bf16.mxu0 0
    %236 = vmatpush1.bf16.msra.mxu0 0
    %237 = vmatprep.subr.bf16.mxu0 0
    %238 = vmatpush1.bf16.msra.mxu0 0
    %239 = vmatprep.subr.bf16.mxu0 0
    %240 = vmatpush1.bf16.msra.mxu0 0
    %241 = vmatprep.subr.bf16.mxu0 0
    %242 = vmatpush1.bf16.msra.mxu0 0
    %243 = vmatprep.mubr.bf16.mxu0 0
    %244 = vmatmul.mubr.bf16.gmra.mrb[0].mxu0 %v196
    %v245 = vpop.f32.mrb[0].mxu0
    %v246 = vadd.f32 %v121, %v245
    %v247 = vpop.f32.mrb[0].mxu0
    %v248 = vadd.f32 %v125, %v247
    %v249 = vpop.f32.mrb[0].mxu0
    %v250 = vpop.f32.mrb[0].mxu0
    %251 = vdwg.mxu0
    %252 = vmatprep.subr.bf16.mxu0 %v177
    %253 = vmatpush1.bf16.msra.mxu0 %v176
    %254 = vmatprep.subr.bf16.mxu0 %v181
    %255 = vmatpush1.bf16.msra.mxu0 %v180
    %256 = vmatprep.subr.bf16.mxu0 %v209
    %257 = vmatpush1.bf16.msra.mxu0 %v206
    %258 = vmatprep.subr.bf16.mxu0 0
    %259 = vmatpush1.bf16.msra.mxu0 0
    %260 = vmatprep.subr.bf16.mxu0 0
    %261 = vmatpush1.bf16.msra.mxu0 0
    %262 = vmatprep.subr.bf16.mxu0 0
    %263 = vmatpush1.bf16.msra.mxu0 0
    %264 = vmatprep.subr.bf16.mxu0 0
    %265 = vmatpush1.bf16.msra.mxu0 0
    %266 = vmatprep.subr.bf16.mxu0 0
    %267 = vmatpush1.bf16.msra.mxu0 0
    %268 = vmatprep.subr.bf16.mxu0 0
    %269 = vmatpush1.bf16.msra.mxu0 0
    %270 = vmatprep.subr.bf16.mxu0 0
    %271 = vmatpush1.bf16.msra.mxu0 0
    %272 = vmatprep.subr.bf16.mxu0 0
    %273 = vmatpush1.bf16.msra.mxu0 0
    %274 = vmatprep.subr.bf16.mxu0 0
    %275 = vmatpush1.bf16.msra.mxu0 0
    %276 = vmatprep.subr.bf16.mxu0 0
    %277 = vmatpush1.bf16.msra.mxu0 0
    %278 = vmatprep.subr.bf16.mxu0 0
    %279 = vmatpush1.bf16.msra.mxu0 0
    %280 = vmatprep.subr.bf16.mxu0 0
    %281 = vmatpush1.bf16.msra.mxu0 0
    %282 = vmatprep.subr.bf16.mxu0 0
    %283 = vmatpush1.bf16.msra.mxu0 0
    %284 = vmatprep.mubr.bf16.mxu0 0
    %285 = vmatmul.mubr.bf16.gmra.mrb[0].mxu0 %v196
    %v286 = vpop.f32.mrb[0].mxu0
    %v287 = vadd.f32 %v129, %v286
    %v288 = vpop.f32.mrb[0].mxu0
    %v289 = vadd.f32 %v133, %v288
    %v290 = vpop.f32.mrb[0].mxu0
    %v291 = vpop.f32.mrb[0].mxu0
    %292 = vdwg.mxu0
    %v293 = vtanh.pop %v246
    %v294 = vtanh.pop %v248
    %v295 = vtanh.pop %v287
    %v296 = vtanh.pop %v289
    %v297 = vpack.c.bf16 %v293, %v293
    %v298 = vpack.c.bf16 %v294, %v294
    %v299 = vpack.c.bf16 %v295, %v295
    %v300 = vpack.c.bf16 %v296, %v296
    %v301 = vld [vmem:[#allocation7] sm:$0xff]
    %v302 = vld [vmem:[#allocation7 + $0x8] sm:$0xff]
    %v303 = vld [vmem:[#allocation7 + $0x10] sm:$0xff]
    %v304 = vld [vmem:[#allocation7 + $0x18] sm:$0xff]
    %v305 = vld [vmem:[#allocation7 + $0x20] sm:$0xff]
    %v306 = vld [vmem:[#allocation7 + $0x28] sm:$0xff]
    %v307 = vld [vmem:[#allocation7 + $0x30] sm:$0xff]
    %v308 = vld [vmem:[#allocation7 + $0x38] sm:$0xff]
    %v309 = vld [vmem:[#allocation7 + $0x40] sm:$0xff]
    %v310 = vld [vmem:[#allocation7 + $0x48] sm:$0xff]
    %v311 = vld [vmem:[#allocation7 + $0x50] sm:$0xff]
    %v312 = vld [vmem:[#allocation7 + $0x58] sm:$0xff]
    %v313 = vld [vmem:[#allocation7 + $0x60] sm:$0xff]
    %v314 = vld [vmem:[#allocation7 + $0x68] sm:$0xff]
    %v315 = vld [vmem:[#allocation7 + $0x70] sm:$0xff]
    %v316 = vld [vmem:[#allocation7 + $0x78] sm:$0xff]
    %v317 = vld [vmem:[#allocation7 + $0x80] sm:$0xff]
    %v318 = vld [vmem:[#allocation7 + $0x88] sm:$0xff]
    %v319 = vld [vmem:[#allocation7 + $0x90] sm:$0xff]
    %v320 = vld [vmem:[#allocation7 + $0x98] sm:$0xff]
    %v321 = vld [vmem:[#allocation7 + $0xa0] sm:$0xff]
    %v322 = vld [vmem:[#allocation7 + $0xa8] sm:$0xff]
    %v323 = vld [vmem:[#allocation7 + $0xb0] sm:$0xff]
    %v324 = vld [vmem:[#allocation7 + $0xb8] sm:$0xff]
    %v325 = vld [vmem:[#allocation7 + $0xc0] sm:$0xff]
    %v326 = vld [vmem:[#allocation7 + $0xc8] sm:$0xff]
    %v327 = vld [vmem:[#allocation7 + $0xd0] sm:$0xff]
    %v328 = vld [vmem:[#allocation7 + $0xd8] sm:$0xff]
    %v329 = vld [vmem:[#allocation7 + $0xe0] sm:$0xff]
    %v330 = vld [vmem:[#allocation7 + $0xe8] sm:$0xff]
    %v331 = vld [vmem:[#allocation7 + $0xf0] sm:$0xff]
    %v332 = vld [vmem:[#allocation7 + $0xf8] sm:$0xff]
    %v333 = vld [vmem:[%s4] sm:$0x3]
    %v335 = vlaneseq
    %v336 = vshrl.u32 %v335, 7
    %v337 = vsub.s32 0, %v336
    %v338 = vrot.slane %v333, %v337
    %v339 = vlaneseq
    %v340 = vshrl.u32 %v339, 7
    %v341 = vsub.s32 1, %v340
    %v342 = vrot.slane %v333, %v341
    %v377 = vunpack.c.l.b16 %v301
    %v378 = vunpack.c.h.b16 %v301
    %v379 = vunpack.c.l.b16 %v302
    %v380 = vunpack.c.h.b16 %v302
    %v381 = vunpack.c.l.b16 %v303
    %v382 = vunpack.c.h.b16 %v303
    %v383 = vunpack.c.l.b16 %v304
    %v384 = vunpack.c.h.b16 %v304
    %v385 = vunpack.c.l.b16 %v305
    %v386 = vunpack.c.h.b16 %v305
    %v387 = vunpack.c.l.b16 %v306
    %v388 = vunpack.c.h.b16 %v306
    %v389 = vunpack.c.l.b16 %v307
    %v390 = vunpack.c.h.b16 %v307
    %v391 = vunpack.c.l.b16 %v308
    %v392 = vunpack.c.h.b16 %v308
    %v393 = vunpack.c.l.b16 %v309
    %v394 = vunpack.c.h.b16 %v309
    %v395 = vunpack.c.l.b16 %v310
    %v396 = vunpack.c.h.b16 %v310
    %v397 = vunpack.c.l.b16 %v311
    %v398 = vunpack.c.h.b16 %v311
    %v399 = vunpack.c.l.b16 %v312
    %v400 = vunpack.c.h.b16 %v312
    %v401 = vunpack.c.l.b16 %v313
    %v402 = vunpack.c.h.b16 %v313
    %v403 = vunpack.c.l.b16 %v314
    %v404 = vunpack.c.h.b16 %v314
    %v405 = vunpack.c.l.b16 %v315
    %v406 = vunpack.c.h.b16 %v315
    %v407 = vunpack.c.l.b16 %v316
    %v408 = vunpack.c.h.b16 %v316
    %v409 = vunpack.c.l.b16 %v317
    %v410 = vunpack.c.h.b16 %v317
    %v411 = vunpack.c.l.b16 %v318
    %v412 = vunpack.c.h.b16 %v318
    %v413 = vunpack.c.l.b16 %v319
    %v414 = vunpack.c.h.b16 %v319
    %v415 = vunpack.c.l.b16 %v320
    %v416 = vunpack.c.h.b16 %v320
    %v417 = vunpack.c.l.b16 %v321
    %v418 = vunpack.c.h.b16 %v321
    %v419 = vunpack.c.l.b16 %v322
    %v420 = vunpack.c.h.b16 %v322
    %v421 = vunpack.c.l.b16 %v323
    %v422 = vunpack.c.h.b16 %v323
    %v423 = vunpack.c.l.b16 %v324
    %v424 = vunpack.c.h.b16 %v324
    %v425 = vunpack.c.l.b16 %v325
    %v426 = vunpack.c.h.b16 %v325
    %v427 = vunpack.c.l.b16 %v326
    %v428 = vunpack.c.h.b16 %v326
    %v429 = vunpack.c.l.b16 %v327
    %v430 = vunpack.c.h.b16 %v327
    %v431 = vunpack.c.l.b16 %v328
    %v432 = vunpack.c.h.b16 %v328
    %v433 = vunpack.c.l.b16 %v329
    %v434 = vunpack.c.h.b16 %v329
    %v435 = vunpack.c.l.b16 %v330
    %v436 = vunpack.c.h.b16 %v330
    %v437 = vunpack.c.l.b16 %v331
    %v438 = vunpack.c.h.b16 %v331
    %v439 = vunpack.c.l.b16 %v332
    %v440 = vunpack.c.h.b16 %v332
    %v441 = vpack.c.b16 %v379, %v377
    %v442 = vpack.c.b16 %v380, %v378
    %v443 = vpack.c.b16 %v383, %v381
    %v444 = vpack.c.b16 %v384, %v382
    %v445 = vpack.c.b16 %v387, %v385
    %v446 = vpack.c.b16 %v388, %v386
    %v447 = vpack.c.b16 %v391, %v389
    %v448 = vpack.c.b16 %v392, %v390
    %v449 = vpack.c.b16 %v395, %v393
    %v450 = vpack.c.b16 %v396, %v394
    %v451 = vpack.c.b16 %v399, %v397
    %v452 = vpack.c.b16 %v400, %v398
    %v453 = vpack.c.b16 %v403, %v401
    %v454 = vpack.c.b16 %v404, %v402
    %v455 = vpack.c.b16 %v407, %v405
    %v456 = vpack.c.b16 %v408, %v406
    %v457 = vpack.c.b16 %v411, %v409
    %v458 = vpack.c.b16 %v412, %v410
    %v459 = vpack.c.b16 %v415, %v413
    %v460 = vpack.c.b16 %v416, %v414
    %v461 = vpack.c.b16 %v419, %v417
    %v462 = vpack.c.b16 %v420, %v418
    %v463 = vpack.c.b16 %v423, %v421
    %v464 = vpack.c.b16 %v424, %v422
    %v465 = vpack.c.b16 %v427, %v425
    %v466 = vpack.c.b16 %v428, %v426
    %v467 = vpack.c.b16 %v431, %v429
    %v468 = vpack.c.b16 %v432, %v430
    %v469 = vpack.c.b16 %v435, %v433
    %v470 = vpack.c.b16 %v436, %v434
    %v471 = vpack.c.b16 %v439, %v437
    %v472 = vpack.c.b16 %v440, %v438
    %505 = vmatprep.subr.bf16.mxu0 %v442
    %506 = vmatpush1.bf16.msra.mxu0 %v441
    %507 = vmatprep.subr.bf16.mxu0 %v444
    %508 = vmatpush1.bf16.msra.mxu0 %v443
    %509 = vmatprep.subr.bf16.mxu0 %v446
    %510 = vmatpush1.bf16.msra.mxu0 %v445
    %511 = vmatprep.subr.bf16.mxu0 %v448
    %512 = vmatpush1.bf16.msra.mxu0 %v447
    %513 = vmatprep.subr.bf16.mxu0 %v450
    %514 = vmatpush1.bf16.msra.mxu0 %v449
    %515 = vmatprep.subr.bf16.mxu0 %v452
    %516 = vmatpush1.bf16.msra.mxu0 %v451
    %517 = vmatprep.subr.bf16.mxu0 %v454
    %518 = vmatpush1.bf16.msra.mxu0 %v453
    %519 = vmatprep.subr.bf16.mxu0 %v456
    %520 = vmatpush1.bf16.msra.mxu0 %v455
    %521 = vmatprep.subr.bf16.mxu0 %v458
    %522 = vmatpush1.bf16.msra.mxu0 %v457
    %523 = vmatprep.subr.bf16.mxu0 %v460
    %524 = vmatpush1.bf16.msra.mxu0 %v459
    %525 = vmatprep.subr.bf16.mxu0 %v462
    %526 = vmatpush1.bf16.msra.mxu0 %v461
    %527 = vmatprep.subr.bf16.mxu0 %v464
    %528 = vmatpush1.bf16.msra.mxu0 %v463
    %529 = vmatprep.subr.bf16.mxu0 %v466
    %530 = vmatpush1.bf16.msra.mxu0 %v465
    %531 = vmatprep.subr.bf16.mxu0 %v468
    %532 = vmatpush1.bf16.msra.mxu0 %v467
    %533 = vmatprep.subr.bf16.mxu0 %v470
    %534 = vmatpush1.bf16.msra.mxu0 %v469
    %535 = vmatprep.subr.bf16.mxu0 %v472
    %536 = vmatpush1.bf16.msra.mxu0 %v471
    %537 = vmatprep.mubr.bf16.mxu0 %v298
    %538 = vmatmul.mubr.bf16.gmra.mrb[0].mxu0 %v297
    %v539 = vpop.f32.mrb[0].mxu0
    %v540 = vadd.f32 %v338, %v539
    %v541 = vpop.f32.mrb[0].mxu0
    %v542 = vadd.f32 %v342, %v541
    %v543 = vpop.f32.mrb[0].mxu0
    %v544 = vpop.f32.mrb[0].mxu0
    %545 = vdwg.mxu0
    %v546 = vtanh.pop %v540
    %v547 = vtanh.pop %v542
    %v548 = vpack.c.bf16 %v546, %v546
    %v549 = vpack.c.bf16 %v547, %v547
    %v550 = vld [vmem:[#allocation8] sm:$0xff]
    %v551 = vld [vmem:[#allocation8 + $0x8] sm:$0xff]
    %v552 = vld [vmem:[#allocation8 + $0x10] sm:$0xff]
    %v553 = vld [vmem:[#allocation8 + $0x18] sm:$0xff]
    %v554 = vld [vmem:[#allocation8 + $0x20] sm:$0xff]
    %v555 = vld [vmem:[#allocation8 + $0x28] sm:$0xff]
    %v556 = vld [vmem:[#allocation8 + $0x30] sm:$0xff]
    %v557 = vld [vmem:[#allocation8 + $0x38] sm:$0xff]
    %v558 = vld [vmem:[#allocation8 + $0x40] sm:$0xff]
    %v559 = vld [vmem:[#allocation8 + $0x48] sm:$0xff]
    %v560 = vld [vmem:[#allocation8 + $0x50] sm:$0xff]
    %v561 = vld [vmem:[#allocation8 + $0x58] sm:$0xff]
    %v562 = vld [vmem:[#allocation8 + $0x60] sm:$0xff]
    %v563 = vld [vmem:[#allocation8 + $0x68] sm:$0xff]
    %v564 = vld [vmem:[#allocation8 + $0x70] sm:$0xff]
    %v565 = vld [vmem:[#allocation8 + $0x78] sm:$0xff]
    %v566 = vld [vmem:[#allocation8 + $0x80] sm:$0xff]
    %v567 = vld [vmem:[#allocation8 + $0x88] sm:$0xff]
    %v568 = vld [vmem:[#allocation8 + $0x90] sm:$0xff]
    %v569 = vld [vmem:[#allocation8 + $0x98] sm:$0xff]
    %v570 = vld [vmem:[#allocation8 + $0xa0] sm:$0xff]
    %v571 = vld [vmem:[#allocation8 + $0xa8] sm:$0xff]
    %v572 = vld [vmem:[#allocation8 + $0xb0] sm:$0xff]
    %v573 = vld [vmem:[#allocation8 + $0xb8] sm:$0xff]
    %v574 = vld [vmem:[#allocation8 + $0xc0] sm:$0xff]
    %v575 = vld [vmem:[#allocation8 + $0xc8] sm:$0xff]
    %v576 = vld [vmem:[#allocation8 + $0xd0] sm:$0xff]
    %v577 = vld [vmem:[#allocation8 + $0xd8] sm:$0xff]
    %v578 = vld [vmem:[#allocation8 + $0xe0] sm:$0xff]
    %v579 = vld [vmem:[#allocation8 + $0xe8] sm:$0xff]
    %v580 = vld [vmem:[#allocation8 + $0xf0] sm:$0xff]
    %v581 = vld [vmem:[#allocation8 + $0xf8] sm:$0xff]
    %v582 = vld [vmem:[%s6] sm:$0x3]
    %v584 = vlaneseq
    %v585 = vshrl.u32 %v584, 7
    %v586 = vsub.s32 0, %v585
    %v587 = vrot.slane %v582, %v586
    %v588 = vlaneseq
    %v589 = vshrl.u32 %v588, 7
    %v590 = vsub.s32 1, %v589
    %v591 = vrot.slane %v582, %v590
    %v626 = vunpack.c.l.b16 %v550
    %v627 = vunpack.c.h.b16 %v550
    %v628 = vunpack.c.l.b16 %v551
    %v629 = vunpack.c.h.b16 %v551
    %v630 = vunpack.c.l.b16 %v552
    %v631 = vunpack.c.h.b16 %v552
    %v632 = vunpack.c.l.b16 %v553
    %v633 = vunpack.c.h.b16 %v553
    %v634 = vunpack.c.l.b16 %v554
    %v635 = vunpack.c.h.b16 %v554
    %v636 = vunpack.c.l.b16 %v555
    %v637 = vunpack.c.h.b16 %v555
    %v638 = vunpack.c.l.b16 %v556
    %v639 = vunpack.c.h.b16 %v556
    %v640 = vunpack.c.l.b16 %v557
    %v641 = vunpack.c.h.b16 %v557
    %v642 = vunpack.c.l.b16 %v558
    %v643 = vunpack.c.h.b16 %v558
    %v644 = vunpack.c.l.b16 %v559
    %v645 = vunpack.c.h.b16 %v559
    %v646 = vunpack.c.l.b16 %v560
    %v647 = vunpack.c.h.b16 %v560
    %v648 = vunpack.c.l.b16 %v561
    %v649 = vunpack.c.h.b16 %v561
    %v650 = vunpack.c.l.b16 %v562
    %v651 = vunpack.c.h.b16 %v562
    %v652 = vunpack.c.l.b16 %v563
    %v653 = vunpack.c.h.b16 %v563
    %v654 = vunpack.c.l.b16 %v564
    %v655 = vunpack.c.h.b16 %v564
    %v656 = vunpack.c.l.b16 %v565
    %v657 = vunpack.c.h.b16 %v565
    %v658 = vunpack.c.l.b16 %v566
    %v659 = vunpack.c.h.b16 %v566
    %v660 = vunpack.c.l.b16 %v567
    %v661 = vunpack.c.h.b16 %v567
    %v662 = vunpack.c.l.b16 %v568
    %v663 = vunpack.c.h.b16 %v568
    %v664 = vunpack.c.l.b16 %v569
    %v665 = vunpack.c.h.b16 %v569
    %v666 = vunpack.c.l.b16 %v570
    %v667 = vunpack.c.h.b16 %v570
    %v668 = vunpack.c.l.b16 %v571
    %v669 = vunpack.c.h.b16 %v571
    %v670 = vunpack.c.l.b16 %v572
    %v671 = vunpack.c.h.b16 %v572
    %v672 = vunpack.c.l.b16 %v573
    %v673 = vunpack.c.h.b16 %v573
    %v674 = vunpack.c.l.b16 %v574
    %v675 = vunpack.c.h.b16 %v574
    %v676 = vunpack.c.l.b16 %v575
    %v677 = vunpack.c.h.b16 %v575
    %v678 = vunpack.c.l.b16 %v576
    %v679 = vunpack.c.h.b16 %v576
    %v680 = vunpack.c.l.b16 %v577
    %v681 = vunpack.c.h.b16 %v577
    %v682 = vunpack.c.l.b16 %v578
    %v683 = vunpack.c.h.b16 %v578
    %v684 = vunpack.c.l.b16 %v579
    %v685 = vunpack.c.h.b16 %v579
    %v686 = vunpack.c.l.b16 %v580
    %v687 = vunpack.c.h.b16 %v580
    %v688 = vunpack.c.l.b16 %v581
    %v689 = vunpack.c.h.b16 %v581
    %v690 = vpack.c.b16 %v628, %v626
    %v691 = vpack.c.b16 %v629, %v627
    %v692 = vpack.c.b16 %v632, %v630
    %v693 = vpack.c.b16 %v633, %v631
    %v694 = vpack.c.b16 %v636, %v634
    %v695 = vpack.c.b16 %v637, %v635
    %v696 = vpack.c.b16 %v640, %v638
    %v697 = vpack.c.b16 %v641, %v639
    %v698 = vpack.c.b16 %v644, %v642
    %v699 = vpack.c.b16 %v645, %v643
    %v700 = vpack.c.b16 %v648, %v646
    %v701 = vpack.c.b16 %v649, %v647
    %v702 = vpack.c.b16 %v652, %v650
    %v703 = vpack.c.b16 %v653, %v651
    %v704 = vpack.c.b16 %v656, %v654
    %v705 = vpack.c.b16 %v657, %v655
    %v706 = vpack.c.b16 %v660, %v658
    %v707 = vpack.c.b16 %v661, %v659
    %v708 = vpack.c.b16 %v664, %v662
    %v709 = vpack.c.b16 %v665, %v663
    %v710 = vpack.c.b16 %v668, %v666
    %v711 = vpack.c.b16 %v669, %v667
    %v712 = vpack.c.b16 %v672, %v670
    %v713 = vpack.c.b16 %v673, %v671
    %v714 = vpack.c.b16 %v676, %v674
    %v715 = vpack.c.b16 %v677, %v675
    %v716 = vpack.c.b16 %v680, %v678
    %v717 = vpack.c.b16 %v681, %v679
    %v718 = vpack.c.b16 %v684, %v682
    %v719 = vpack.c.b16 %v685, %v683
    %v720 = vpack.c.b16 %v688, %v686
    %v721 = vpack.c.b16 %v689, %v687
    %754 = vmatprep.subr.bf16.mxu0 %v691
    %755 = vmatpush1.bf16.msra.mxu0 %v690
    %756 = vmatprep.subr.bf16.mxu0 %v693
    %757 = vmatpush1.bf16.msra.mxu0 %v692
    %758 = vmatprep.subr.bf16.mxu0 %v695
    %759 = vmatpush1.bf16.msra.mxu0 %v694
    %760 = vmatprep.subr.bf16.mxu0 %v697
    %761 = vmatpush1.bf16.msra.mxu0 %v696
    %762 = vmatprep.subr.bf16.mxu0 %v699
    %763 = vmatpush1.bf16.msra.mxu0 %v698
    %764 = vmatprep.subr.bf16.mxu0 %v701
    %765 = vmatpush1.bf16.msra.mxu0 %v700
    %766 = vmatprep.subr.bf16.mxu0 %v703
    %767 = vmatpush1.bf16.msra.mxu0 %v702
    %768 = vmatprep.subr.bf16.mxu0 %v705
    %769 = vmatpush1.bf16.msra.mxu0 %v704
    %770 = vmatprep.subr.bf16.mxu0 %v707
    %771 = vmatpush1.bf16.msra.mxu0 %v706
    %772 = vmatprep.subr.bf16.mxu0 %v709
    %773 = vmatpush1.bf16.msra.mxu0 %v708
    %774 = vmatprep.subr.bf16.mxu0 %v711
    %775 = vmatpush1.bf16.msra.mxu0 %v710
    %776 = vmatprep.subr.bf16.mxu0 %v713
    %777 = vmatpush1.bf16.msra.mxu0 %v712
    %778 = vmatprep.subr.bf16.mxu0 %v715
    %779 = vmatpush1.bf16.msra.mxu0 %v714
    %780 = vmatprep.subr.bf16.mxu0 %v717
    %781 = vmatpush1.bf16.msra.mxu0 %v716
    %782 = vmatprep.subr.bf16.mxu0 %v719
    %783 = vmatpush1.bf16.msra.mxu0 %v718
    %784 = vmatprep.subr.bf16.mxu0 %v721
    %785 = vmatpush1.bf16.msra.mxu0 %v720
    %786 = vmatprep.mubr.bf16.mxu0 %v300
    %787 = vmatmul.mubr.bf16.gmra.mrb[0].mxu0 %v299
    %v788 = vpop.f32.mrb[0].mxu0
    %v789 = vadd.f32 %v587, %v788
    %v790 = vpop.f32.mrb[0].mxu0
    %v791 = vadd.f32 %v591, %v790
    %v792 = vpop.f32.mrb[0].mxu0
    %v793 = vpop.f32.mrb[0].mxu0
    %794 = vdwg.mxu0
    %v795 = vtanh.pop %v789
    %v796 = vtanh.pop %v791
    %v797 = vpack.c.bf16 %v795, %v795
    %v798 = vpack.c.bf16 %v796, %v796
    %v799 = vld [vmem:[#allocation10] sm:$0xf]
    %v800 = vld [vmem:[#allocation10 + $0x4] sm:$0xf]
    %v801 = vld [vmem:[#allocation10 + $0x8] sm:$0xf]
    %v802 = vld [vmem:[#allocation10 + $0xc] sm:$0xf]
    %v803 = vld [vmem:[#allocation10 + $0x10] sm:$0xf]
    %v804 = vld [vmem:[#allocation10 + $0x14] sm:$0xf]
    %v805 = vld [vmem:[#allocation10 + $0x18] sm:$0xf]
    %v806 = vld [vmem:[#allocation10 + $0x1c] sm:$0xf]
    %v807 = vld [vmem:[#allocation10 + $0x20] sm:$0xf]
    %v808 = vld [vmem:[#allocation10 + $0x24] sm:$0xf]
    %v809 = vld [vmem:[#allocation10 + $0x28] sm:$0xf]
    %v810 = vld [vmem:[#allocation10 + $0x2c] sm:$0xf]
    %v811 = vld [vmem:[#allocation10 + $0x30] sm:$0xf]
    %v812 = vld [vmem:[#allocation10 + $0x34] sm:$0xf]
    %v813 = vld [vmem:[#allocation10 + $0x38] sm:$0xf]
    %v814 = vld [vmem:[#allocation10 + $0x3c] sm:$0xf]
    %v815 = vld [vmem:[#allocation10 + $0x40] sm:$0xf]
    %v816 = vld [vmem:[#allocation10 + $0x44] sm:$0xf]
    %v817 = vld [vmem:[#allocation10 + $0x48] sm:$0xf]
    %v818 = vld [vmem:[#allocation10 + $0x4c] sm:$0xf]
    %v819 = vld [vmem:[#allocation10 + $0x50] sm:$0xf]
    %v820 = vld [vmem:[#allocation10 + $0x54] sm:$0xf]
    %v821 = vld [vmem:[#allocation10 + $0x58] sm:$0xf]
    %v822 = vld [vmem:[#allocation10 + $0x5c] sm:$0xf]
    %v823 = vld [vmem:[#allocation10 + $0x60] sm:$0xf]
    %v824 = vld [vmem:[#allocation10 + $0x64] sm:$0xf]
    %v825 = vld [vmem:[#allocation10 + $0x68] sm:$0xf]
    %v826 = vld [vmem:[#allocation10 + $0x6c] sm:$0xf]
    %v827 = vld [vmem:[#allocation10 + $0x70] sm:$0xf]
    %v828 = vld [vmem:[#allocation10 + $0x74] sm:$0xf]
    %v829 = vld [vmem:[#allocation10 + $0x78] sm:$0xf]
    %v830 = vld [vmem:[#allocation10 + $0x7c] sm:$0xf]
    %v831 = vld [vmem:[#allocation10 + $0x80] sm:$0xf]
    %v832 = vld [vmem:[#allocation10 + $0x84] sm:$0xf]
    %v833 = vld [vmem:[#allocation10 + $0x88] sm:$0xf]
    %v834 = vld [vmem:[#allocation10 + $0x8c] sm:$0xf]
    %v835 = vld [vmem:[#allocation10 + $0x90] sm:$0xf]
    %v836 = vld [vmem:[#allocation10 + $0x94] sm:$0xf]
    %v837 = vld [vmem:[#allocation10 + $0x98] sm:$0xf]
    %v838 = vld [vmem:[#allocation10 + $0x9c] sm:$0xf]
    %v839 = vld [vmem:[#allocation10 + $0xa0] sm:$0xf]
    %v840 = vld [vmem:[#allocation10 + $0xa4] sm:$0xf]
    %v841 = vld [vmem:[#allocation10 + $0xa8] sm:$0xf]
    %v842 = vld [vmem:[#allocation10 + $0xac] sm:$0xf]
    %v843 = vld [vmem:[#allocation10 + $0xb0] sm:$0xf]
    %v844 = vld [vmem:[#allocation10 + $0xb4] sm:$0xf]
    %v845 = vld [vmem:[#allocation10 + $0xb8] sm:$0xf]
    %v846 = vld [vmem:[#allocation10 + $0xbc] sm:$0xf]
    %v847 = vld [vmem:[#allocation10 + $0xc0] sm:$0xf]
    %v848 = vld [vmem:[#allocation10 + $0xc4] sm:$0xf]
    %v849 = vld [vmem:[#allocation10 + $0xc8] sm:$0xf]
    %v850 = vld [vmem:[#allocation10 + $0xcc] sm:$0xf]
    %v851 = vld [vmem:[#allocation10 + $0xd0] sm:$0xf]
    %v852 = vld [vmem:[#allocation10 + $0xd4] sm:$0xf]
    %v853 = vld [vmem:[#allocation10 + $0xd8] sm:$0xf]
    %v854 = vld [vmem:[#allocation10 + $0xdc] sm:$0xf]
    %v855 = vld [vmem:[#allocation10 + $0xe0] sm:$0xf]
    %v856 = vld [vmem:[#allocation10 + $0xe4] sm:$0xf]
    %v857 = vld [vmem:[#allocation10 + $0xe8] sm:$0xf]
    %v858 = vld [vmem:[#allocation10 + $0xec] sm:$0xf]
    %v859 = vld [vmem:[#allocation10 + $0xf0] sm:$0xf]
    %v860 = vld [vmem:[#allocation10 + $0xf4] sm:$0xf]
    %v861 = vld [vmem:[#allocation10 + $0xf8] sm:$0xf]
    %v862 = vld [vmem:[#allocation10 + $0xfc] sm:$0xf]
    %v863 = vld [vmem:[%s8] sm:$0x1]
    %v865 = vlaneseq
    %v866 = vshrl.u32 %v865, 7
    %v867 = vsub.s32 0, %v866
    %v868 = vrot.slane %v863, %v867
    %v934 = vunpack.c.l.b16 %v799
    %v935 = vunpack.c.l.b16 %v800
    %v936 = vunpack.c.l.b16 %v801
    %v937 = vunpack.c.l.b16 %v802
    %v938 = vunpack.c.l.b16 %v803
    %v939 = vunpack.c.l.b16 %v804
    %v940 = vunpack.c.l.b16 %v805
    %v941 = vunpack.c.l.b16 %v806
    %v942 = vunpack.c.l.b16 %v807
    %v943 = vunpack.c.l.b16 %v808
    %v944 = vunpack.c.l.b16 %v809
    %v945 = vunpack.c.l.b16 %v810
    %v946 = vunpack.c.l.b16 %v811
    %v947 = vunpack.c.l.b16 %v812
    %v948 = vunpack.c.l.b16 %v813
    %v949 = vunpack.c.l.b16 %v814
    %v950 = vunpack.c.l.b16 %v815
    %v951 = vunpack.c.l.b16 %v816
    %v952 = vunpack.c.l.b16 %v817
    %v953 = vunpack.c.l.b16 %v818
    %v954 = vunpack.c.l.b16 %v819
    %v955 = vunpack.c.l.b16 %v820
    %v956 = vunpack.c.l.b16 %v821
    %v957 = vunpack.c.l.b16 %v822
    %v958 = vunpack.c.l.b16 %v823
    %v959 = vunpack.c.l.b16 %v824
    %v960 = vunpack.c.l.b16 %v825
    %v961 = vunpack.c.l.b16 %v826
    %v962 = vunpack.c.l.b16 %v827
    %v963 = vunpack.c.l.b16 %v828
    %v964 = vunpack.c.l.b16 %v829
    %v965 = vunpack.c.l.b16 %v830
    %v966 = vunpack.c.l.b16 %v831
    %v967 = vunpack.c.l.b16 %v832
    %v968 = vunpack.c.l.b16 %v833
    %v969 = vunpack.c.l.b16 %v834
    %v970 = vunpack.c.l.b16 %v835
    %v971 = vunpack.c.l.b16 %v836
    %v972 = vunpack.c.l.b16 %v837
    %v973 = vunpack.c.l.b16 %v838
    %v974 = vunpack.c.l.b16 %v839
    %v975 = vunpack.c.l.b16 %v840
    %v976 = vunpack.c.l.b16 %v841
    %v977 = vunpack.c.l.b16 %v842
    %v978 = vunpack.c.l.b16 %v843
    %v979 = vunpack.c.l.b16 %v844
    %v980 = vunpack.c.l.b16 %v845
    %v981 = vunpack.c.l.b16 %v846
    %v982 = vunpack.c.l.b16 %v847
    %v983 = vunpack.c.l.b16 %v848
    %v984 = vunpack.c.l.b16 %v849
    %v985 = vunpack.c.l.b16 %v850
    %v986 = vunpack.c.l.b16 %v851
    %v987 = vunpack.c.l.b16 %v852
    %v988 = vunpack.c.l.b16 %v853
    %v989 = vunpack.c.l.b16 %v854
    %v990 = vunpack.c.l.b16 %v855
    %v991 = vunpack.c.l.b16 %v856
    %v992 = vunpack.c.l.b16 %v857
    %v993 = vunpack.c.l.b16 %v858
    %v994 = vunpack.c.l.b16 %v859
    %v995 = vunpack.c.l.b16 %v860
    %v996 = vunpack.c.l.b16 %v861
    %v997 = vunpack.c.l.b16 %v862
    %v998 = vpack.c.b16 %v935, %v934
    %v999 = vpack.c.b16 %v937, %v936
    %v1000 = vpack.c.b16 %v939, %v938
    %v1001 = vpack.c.b16 %v941, %v940
    %v1002 = vpack.c.b16 %v943, %v942
    %v1003 = vpack.c.b16 %v945, %v944
    %v1004 = vpack.c.b16 %v947, %v946
    %v1005 = vpack.c.b16 %v949, %v948
    %v1006 = vpack.c.b16 %v951, %v950
    %v1007 = vpack.c.b16 %v953, %v952
    %v1008 = vpack.c.b16 %v955, %v954
    %v1009 = vpack.c.b16 %v957, %v956
    %v1010 = vpack.c.b16 %v959, %v958
    %v1011 = vpack.c.b16 %v961, %v960
    %v1012 = vpack.c.b16 %v963, %v962
    %v1013 = vpack.c.b16 %v965, %v964
    %v1014 = vpack.c.b16 %v967, %v966
    %v1015 = vpack.c.b16 %v969, %v968
    %v1016 = vpack.c.b16 %v971, %v970
    %v1017 = vpack.c.b16 %v973, %v972
    %v1018 = vpack.c.b16 %v975, %v974
    %v1019 = vpack.c.b16 %v977, %v976
    %v1020 = vpack.c.b16 %v979, %v978
    %v1021 = vpack.c.b16 %v981, %v980
    %v1022 = vpack.c.b16 %v983, %v982
    %v1023 = vpack.c.b16 %v985, %v984
    %v1024 = vpack.c.b16 %v987, %v986
    %v1025 = vpack.c.b16 %v989, %v988
    %v1026 = vpack.c.b16 %v991, %v990
    %v1027 = vpack.c.b16 %v993, %v992
    %v1028 = vpack.c.b16 %v995, %v994
    %v1029 = vpack.c.b16 %v997, %v996
    %1062 = vmatprep.subr.bf16.mxu0 0
    %1063 = vmatpush1.bf16.msra.mxu0 %v998
    %1064 = vmatprep.subr.bf16.mxu0 0
    %1065 = vmatpush1.bf16.msra.mxu0 %v999
    %1066 = vmatprep.subr.bf16.mxu0 0
    %1067 = vmatpush1.bf16.msra.mxu0 %v1000
    %1068 = vmatprep.subr.bf16.mxu0 0
    %1069 = vmatpush1.bf16.msra.mxu0 %v1001
    %1070 = vmatprep.subr.bf16.mxu0 0
    %1071 = vmatpush1.bf16.msra.mxu0 %v1002
    %1072 = vmatprep.subr.bf16.mxu0 0
    %1073 = vmatpush1.bf16.msra.mxu0 %v1003
    %1074 = vmatprep.subr.bf16.mxu0 0
    %1075 = vmatpush1.bf16.msra.mxu0 %v1004
    %1076 = vmatprep.subr.bf16.mxu0 0
    %1077 = vmatpush1.bf16.msra.mxu0 %v1005
    %1078 = vmatprep.subr.bf16.mxu0 0
    %1079 = vmatpush1.bf16.msra.mxu0 %v1006
    %1080 = vmatprep.subr.bf16.mxu0 0
    %1081 = vmatpush1.bf16.msra.mxu0 %v1007
    %1082 = vmatprep.subr.bf16.mxu0 0
    %1083 = vmatpush1.bf16.msra.mxu0 %v1008
    %1084 = vmatprep.subr.bf16.mxu0 0
    %1085 = vmatpush1.bf16.msra.mxu0 %v1009
    %1086 = vmatprep.subr.bf16.mxu0 0
    %1087 = vmatpush1.bf16.msra.mxu0 %v1010
    %1088 = vmatprep.subr.bf16.mxu0 0
    %1089 = vmatpush1.bf16.msra.mxu0 %v1011
    %1090 = vmatprep.subr.bf16.mxu0 0
    %1091 = vmatpush1.bf16.msra.mxu0 %v1012
    %1092 = vmatprep.subr.bf16.mxu0 0
    %1093 = vmatpush1.bf16.msra.mxu0 %v1013
    %1094 = vmatprep.mubr.bf16.mxu0 %v549
    %1095 = vmatmul.mubr.bf16.gmra.mrb[0].mxu0 %v548
    %v1096 = vpop.f32.mrb[0].mxu0
    %v1097 = vadd.f32 %v868, %v1096
    %v1098 = vpop.f32.mrb[0].mxu0
    %v1099 = vpop.f32.mrb[0].mxu0
    %v1100 = vpop.f32.mrb[0].mxu0
    %1101 = vdwg.mxu0
    %1102 = vmatprep.subr.bf16.mxu0 0
    %1103 = vmatpush1.bf16.msra.mxu0 %v1014
    %1104 = vmatprep.subr.bf16.mxu0 0
    %1105 = vmatpush1.bf16.msra.mxu0 %v1015
    %1106 = vmatprep.subr.bf16.mxu0 0
    %1107 = vmatpush1.bf16.msra.mxu0 %v1016
    %1108 = vmatprep.subr.bf16.mxu0 0
    %1109 = vmatpush1.bf16.msra.mxu0 %v1017
    %1110 = vmatprep.subr.bf16.mxu0 0
    %1111 = vmatpush1.bf16.msra.mxu0 %v1018
    %1112 = vmatprep.subr.bf16.mxu0 0
    %1113 = vmatpush1.bf16.msra.mxu0 %v1019
    %1114 = vmatprep.subr.bf16.mxu0 0
    %1115 = vmatpush1.bf16.msra.mxu0 %v1020
    %1116 = vmatprep.subr.bf16.mxu0 0
    %1117 = vmatpush1.bf16.msra.mxu0 %v1021
    %1118 = vmatprep.subr.bf16.mxu0 0
    %1119 = vmatpush1.bf16.msra.mxu0 %v1022
    %1120 = vmatprep.subr.bf16.mxu0 0
    %1121 = vmatpush1.bf16.msra.mxu0 %v1023
    %1122 = vmatprep.subr.bf16.mxu0 0
    %1123 = vmatpush1.bf16.msra.mxu0 %v1024
    %1124 = vmatprep.subr.bf16.mxu0 0
    %1125 = vmatpush1.bf16.msra.mxu0 %v1025
    %1126 = vmatprep.subr.bf16.mxu0 0
    %1127 = vmatpush1.bf16.msra.mxu0 %v1026
    %1128 = vmatprep.subr.bf16.mxu0 0
    %1129 = vmatpush1.bf16.msra.mxu0 %v1027
    %1130 = vmatprep.subr.bf16.mxu0 0
    %1131 = vmatpush1.bf16.msra.mxu0 %v1028
    %1132 = vmatprep.subr.bf16.mxu0 0
    %1133 = vmatpush1.bf16.msra.mxu0 %v1029
    %1134 = vmatprep.mubr.bf16.mxu0 %v798
    %1135 = vmatmul.mubr.bf16.gmra.mrb[0].mxu0 %v797
    %v1136 = vpop.f32.mrb[0].mxu0
    %v1137 = vadd.f32 %v1097, %v1136
    %v1138 = vpop.f32.mrb[0].mxu0
    %v1139 = vpop.f32.mrb[0].mxu0
    %v1140 = vpop.f32.mrb[0].mxu0
    %1141 = vdwg.mxu0
    %v1142 = vpack.c.bf16 %v1137, %v1137
    %v1145 = vunpack.c.l.s4 1966171168
    %v1146 = vunpack.c.0.s8 %v1145
    %v1147 = vlaneseq
    %v1148 = vshrl.u32 %v1147, 7
    %v1149 = vsub.s32 %v1146, %v1148
    %v1150 = vrot.slane %v1142, %v1149
    %v1151 = vcombine.high %v1150, %v1150
    %v1153 = vunpack.c.l.s4 1966171168
    %v1154 = vunpack.c.0.s8 %v1153
    %v1155 = vlaneseq
    %v1156 = vshrl.u32 %v1155, 7
    %v1157 = vsub.s32 %v1154, %v1156
    %v1158 = vrot.slane %v1150, %v1157
    %v1160 = vunpack.c.l.s4 1966171168
    %v1161 = vunpack.c.0.s8 %v1160
    %v1162 = vlaneseq
    %v1163 = vshrl.u32 %v1162, 7
    %v1164 = vsub.s32 %v1161, %v1163
    %v1165 = vrot.slane %v1151, %v1164
    %v1166 = vcombine.high %v1158, %v1158
    %v1167 = vcombine.high %v1165, %v1165
    %1172 = vst [vmem:[#allocation11] sm:$0x1] %v1158
    %1173 = vst [vmem:[#allocation11 + $0x1] sm:$0x1] %v1165
    %1174 = vst [vmem:[#allocation11 + $0x2] sm:$0x1] %v1166
    %1175 = vst [vmem:[#allocation11 + $0x3] sm:$0x1] %v1167
    // Predicated region
    $region58: #{tpu_custom_call.1} parent=1 // pred_check
      _
    $region59: #{tpu_custom_call.1} parent=1 // pred_check_branch
      %1177 = sbr.rel (0) target = $region61
    $region60: #{tpu_custom_call.1} parent=1 // pred_region
      %s1179 = ssub.s32 64, 16
      %1180 = vsyncadd [#allocation4], %s1179
      %s1181 = sshll.u32 [#allocation11], 4
      %s1182 = int_to_ptr.vmem [resolvable:$true] %s1181
      %1187 = dma.vmem_to_hbm [thread:$0]  %s1182, 16, %s9, [#allocation4], 16, 16, 1
    $region61: #{tpu_custom_call.1} parent=1 // pred_fallthru
      _
    // Predicated region
    $region62: #{tpu_custom_call.1} parent=1 // pred_check
      _
    $region63: #{tpu_custom_call.1} parent=1 // pred_check_branch
      %1189 = sbr.rel (0) target = $region65
    $region64: #{tpu_custom_call.1} parent=1 // pred_region
      %1190 = dma.done [#allocation4], 64
    $region65: #{tpu_custom_call.1} parent=1 // pred_fallthru
      _
    %1191 = vsyncpa [#allocation3], 1
    %1192 = vsyncpa [#allocation6], 1
    %1193 = vsyncpa [#allocation9], 1
    %1194 = vsyncpa [#allocation4], 1

</llo_original>
